<compile_context>
chip_gen: v5e
topology: v5e:2x2
jax: 0.10.0
libtpu: 0.0.40
codegen_flags: <defaults>
</compile_context>

<pallas_src>
import functools

import jax
import jax.numpy as jnp
from jax.experimental import pallas as pl
from jax.experimental.pallas import tpu as pltpu


def _nll_kernel(pred_ref, tgt_ref, exp_ref, psum_ref, pcnt_ref, *, g):
    """Process one (tile_r, lanes) tile of lane-packed log-probabilities.

    tgt_ref: (tile_r, kdim) -- per packed row: g per-group lane targets
             (or -1 for ignored / padded rows), a 1.0 column, zero padding.
    exp_ref: (kdim, lanes) constant expansion matrix such that
             dot(tgt, exp)[r, l] = t_lane[r, l // C] - l   (exact integers)
    so `diff == 0` is the one-hot gather mask; the lane expansion runs on the
    otherwise-idle MXU instead of a per-group VPU compare/OR loop.
    """
    j = pl.program_id(1)

    @pl.when(j == 0)
    def _init():
        psum_ref[...] = jnp.zeros_like(psum_ref)
        pcnt_ref[...] = jnp.zeros_like(pcnt_ref)

    t = tgt_ref[...]                                        # (tile_r, kdim)
    diff = jnp.dot(t, exp_ref[...], preferred_element_type=jnp.float32)
    match = diff == 0.0                                     # (tile_r, lanes)

    pred = pred_ref[...].astype(jnp.float32)                # (tile_r, lanes)
    # select (no NaN propagation from garbage rows of partial blocks) + a
    # sublane-only reduction into the resident per-lane f32 accumulator.
    psum_ref[...] += jnp.sum(jnp.where(match, pred, 0.0), axis=0,
                             keepdims=True)

    # Valid-target count from the small target block (not the full match).
    valid = (t[:, :g] >= 0).astype(jnp.float32)             # (tile_r, g)
    pcnt_ref[...] += jnp.sum(valid, axis=0, keepdims=True)


def nll_loss(pred, target, *, tile_bytes=2 << 20):
    """Matches torch.nn.functional.nll_loss(pred, target) (mean reduction,
    ignore_index=-100).  pred: (N, C) f32/bf16 log-probs, target: (N,) ints."""
    n, c = pred.shape
    tgt = target.astype(jnp.int32)

    # --- packing factor: pack g rows into one lane-dense packed row --------
    if c >= 128:
        g = 1
    else:
        g_max = max(1, 256 // c)          # keep lanes <= 256 (bf16-exact ids)
        g = 1
        for cand in range(min(g_max, n), 0, -1):
            if n % cand == 0:             # g | N  ->  reshape is copy-free
                g = cand
                break
    lanes = g * c
    rows = n // g
    pred_packed = pred.reshape(rows, lanes)      # row-major merge, no copy

    aug_dtype = jnp.bfloat16 if lanes <= 256 else jnp.float32
    kdim = ((g + 1 + 15) // 16) * 16             # pad MXU contraction dim

    # --- tile sizing: dtype-aware ~tile_bytes of streamed pred per step ----
    itemsize = jnp.dtype(pred.dtype).itemsize
    tile_r = max(32, (tile_bytes // (lanes * itemsize)) // 32 * 32)
    if tile_r >= rows:
        tile_r = rows                             # single full block
    num_tiles = -(-rows // tile_r)

    n_cores = 2 if num_tiles >= 2 else 1          # v7x megacore; harmless on 1-TC
    tpc = -(-num_tiles // n_cores)                # tiles per core
    rows_padded = n_cores * tpc * tile_r

    # --- wrapper-side target preprocessing (tiny arrays, O(N) work) --------
    valid = (tgt >= 0) & (tgt < c)
    lane_tgt = jnp.where(
        valid, tgt + (jnp.arange(n, dtype=jnp.int32) % g) * c, -1)
    lane_tgt = lane_tgt.reshape(rows, g).astype(aug_dtype)
    # Pad packed-row count so every target block is fully defined; padded
    # rows are all -1 -> garbage pred rows in partial/duplicated blocks
    # match nothing and contribute 0 to both the sum and the count.
    lane_tgt = jnp.pad(lane_tgt, ((0, rows_padded - rows), (0, 0)),
                       constant_values=-1)
    t_aug = jnp.concatenate(
        [lane_tgt,
         jnp.ones((rows_padded, 1), aug_dtype),
         jnp.zeros((rows_padded, kdim - g - 1), aug_dtype)], axis=1)

    # Constant expansion matrix:  diff[r, l] = t_lane[r, l // C] - l
    lane = jnp.arange(lanes, dtype=jnp.int32)
    e_rows = (jnp.arange(g, dtype=jnp.int32)[:, None]
              == (lane // c)[None, :]).astype(aug_dtype)          # (g, lanes)
    e_aug = jnp.concatenate(
        [e_rows,
         -lane[None, :].astype(aug_dtype),
         jnp.zeros((kdim - g - 1, lanes), aug_dtype)], axis=0)    # (kdim, lanes)

    nt_m1 = num_tiles - 1
    psum, pcnt = pl.pallas_call(
        functools.partial(_nll_kernel, g=g),
        out_shape=(jax.ShapeDtypeStruct((n_cores, lanes), jnp.float32),
                   jax.ShapeDtypeStruct((n_cores, g), jnp.float32)),
        grid=(n_cores, tpc),
        in_specs=[
            # pred: clamp the block index so an odd tile count never issues a
            # fully out-of-bounds DMA (the duplicate block is masked by -1
            # targets and contributes nothing).
            pl.BlockSpec((tile_r, lanes),
                         lambda cc, j: (jnp.minimum(cc * tpc + j, nt_m1), 0)),
            pl.BlockSpec((tile_r, kdim), lambda cc, j: (cc * tpc + j, 0)),
            pl.BlockSpec((kdim, lanes), lambda cc, j: (0, 0)),   # resident
        ],
        out_specs=(
            pl.BlockSpec((1, lanes), lambda cc, j: (cc, 0)),     # per-core sums
            pl.BlockSpec((1, g), lambda cc, j: (cc, 0)),         # per-core counts
        ),
        compiler_params=pltpu.CompilerParams(
            dimension_semantics=("parallel", "arbitrary")),
    )(pred_packed, t_aug, e_aug)

    total = jnp.sum(psum)
    count = jnp.sum(pcnt)
    # All targets ignored -> 0/0 = NaN, matching PyTorch's nll_loss.
    return -total / count


# Mirrors `get_loss().forward(pred, target)` of the PyTorch module.
def get_loss_forward(pred, target):
    return nll_loss(pred, target)


if __name__ == "__main__":
    key = jax.random.PRNGKey(0)
    ks = jax.random.split(key, 8)

    def ref_nll(pred, tgt):
        nn, cc = pred.shape
        ok = (tgt >= 0) & (tgt < cc)
        picked = pred.astype(jnp.float32)[jnp.arange(nn),
                                          jnp.clip(tgt, 0, cc - 1)]
        return -jnp.sum(jnp.where(ok, picked, 0.0)) / jnp.sum(ok)

    # 1) C=32 head, all targets valid (single tile, packing g=8 -> 256 lanes).
    n1, c1 = 64, 32
    p1 = jax.nn.log_softmax(jax.random.normal(ks[0], (n1, c1), jnp.float32), -1)
    t1 = jax.random.randint(ks[1], (n1,), 0, c1, dtype=jnp.int32)
    l1 = nll_loss(p1, t1)
    jax.block_until_ready(l1)
    assert jnp.allclose(l1, ref_nll(p1, t1), atol=1e-5, rtol=1e-5), (l1, ref_nll(p1, t1))

    # 2) ModelNet40-style head, N not a multiple of the max packing factor,
    #    plus PyTorch-default ignore_index=-100 targets.
    n2, c2 = 50, 40
    p2 = jax.nn.log_softmax(jax.random.normal(ks[2], (n2, c2), jnp.float32), -1)
    t2 = jax.random.randint(ks[3], (n2,), 0, c2, dtype=jnp.int32).at[::7].set(-100)
    l2 = nll_loss(p2, t2)
    jax.block_until_ready(l2)
    assert jnp.allclose(l2, ref_nll(p2, t2), atol=1e-5, rtol=1e-5), (l2, ref_nll(p2, t2))

    # 3) bf16 log-probs stream at half the HBM bytes; accumulation stays f32.
    p3 = p1.astype(jnp.bfloat16)
    l3 = nll_loss(p3, t1)
    jax.block_until_ready(l3)
    assert jnp.allclose(l3, ref_nll(p3, t1), atol=1e-4, rtol=1e-4), (l3, ref_nll(p3, t1))

    # 4) Multi-tile path: 2-way core split, partial last tile and a clamped
    #    duplicate block (tiny tile_bytes forces num_tiles=3 on small data).
    n4, c4 = 540, 40
    p4 = jax.nn.log_softmax(jax.random.normal(ks[4], (n4, c4), jnp.float32), -1)
    t4 = jax.random.randint(ks[5], (n4,), 0, c4, dtype=jnp.int32).at[::11].set(-100)
    l4 = nll_loss(p4, t4, tile_bytes=4096)
    jax.block_until_ready(l4)
    assert jnp.allclose(l4, ref_nll(p4, t4), atol=1e-4, rtol=1e-4), (l4, ref_nll(p4, t4))

    # 5) Wide head (C > 256) exercises the f32 expansion-matrix path (g=1).
    n5, c5 = 40, 300
    p5 = jax.nn.log_softmax(jax.random.normal(ks[6], (n5, c5), jnp.float32), -1)
    t5 = jax.random.randint(ks[7], (n5,), 0, c5, dtype=jnp.int32)
    l5 = nll_loss(p5, t5)
    jax.block_until_ready(l5)
    assert jnp.allclose(l5, ref_nll(p5, t5), atol=1e-4, rtol=1e-4), (l5, ref_nll(p5, t5))

    print("KERNEL_OK")
</pallas_src>

<mosaic_0001>
module attributes {stable_mosaic.version = 11 : i64} {
  func.func @_nll_kernel(%arg0: i32, %arg1: i32, %arg2: memref<8x256xf32, #tpu.memory_space<vmem>>, %arg3: memref<8x16xbf16, #tpu.memory_space<vmem>>, %arg4: memref<16x256xbf16, #tpu.memory_space<vmem>>, %arg5: memref<1x256xf32, #tpu.memory_space<vmem>>, %arg6: memref<1x8xf32, #tpu.memory_space<vmem>>) attributes {dimension_semantics = [#tpu.dimension_semantics<parallel>, #tpu.dimension_semantics<arbitrary>], iteration_bounds = array<i64: 1, 1>, scalar_prefetch = 0 : i64, scratch_operands = 0 : i64, tpu.core_type = #tpu.core_type<tc>, window_params = [{transform_indices = @transform_0, window_bounds = array<i64: 8, 256>}, {transform_indices = @transform_1, window_bounds = array<i64: 8, 16>}, {pipeline_mode = #tpu.pipeline_mode<synchronous>, transform_indices = @transform_2, window_bounds = array<i64: 16, 256>}, {transform_indices = @transform_3, window_bounds = array<i64: 1, 256>}, {transform_indices = @transform_4, window_bounds = array<i64: 1, 8>}]} {
    %c0_i32 = arith.constant 0 : i32
    %0 = arith.cmpi eq, %arg1, %c0_i32 : i32
    %1 = arith.extui %0 : i1 to i32
    %c0_i32_0 = arith.constant 0 : i32
    %2 = arith.cmpi ne, %1, %c0_i32_0 : i32
    scf.if %2 {
      %cst_19 = arith.constant 0.000000e+00 : f32
      %26 = vector.broadcast %cst_19 : f32 to vector<1x256xf32>
      %c0_20 = arith.constant 0 : index
      %c0_21 = arith.constant 0 : index
      %27 = vector.load %arg5[%c0_20, %c0_21] : memref<1x256xf32, #tpu.memory_space<vmem>>, vector<1x256xf32>
      tpu.vector_store %arg5[%c0_20, %c0_21], %26 {strides = array<i32>} : memref<1x256xf32, #tpu.memory_space<vmem>>, vector<1x256xf32>,
      %cst_22 = arith.constant 0.000000e+00 : f32
      %28 = vector.broadcast %cst_22 : f32 to vector<1x8xf32>
      %c0_23 = arith.constant 0 : index
      %c0_24 = arith.constant 0 : index
      %29 = vector.load %arg6[%c0_23, %c0_24] : memref<1x8xf32, #tpu.memory_space<vmem>>, vector<1x8xf32>
      tpu.vector_store %arg6[%c0_23, %c0_24], %28 {strides = array<i32>} : memref<1x8xf32, #tpu.memory_space<vmem>>, vector<1x8xf32>,
    } else {
    }
    %c0 = arith.constant 0 : index
    %c0_1 = arith.constant 0 : index
    %3 = vector.load %arg3[%c0, %c0_1] : memref<8x16xbf16, #tpu.memory_space<vmem>>, vector<8x16xbf16>
    %c0_2 = arith.constant 0 : index
    %c0_3 = arith.constant 0 : index
    %4 = vector.load %arg4[%c0_2, %c0_3] : memref<16x256xbf16, #tpu.memory_space<vmem>>, vector<16x256xbf16>
    %cst = arith.constant dense<0.000000e+00> : vector<8x256xf32>
    %5 = tpu.matmul %3, %4, %cst {dimension_numbers = #tpu.dot_dimension_numbers<[1], [0], [0], [1], [0, 0, 1, 1], [], []>} : vector<8x16xbf16>, vector<16x256xbf16>, vector<8x256xf32> -> vector<8x256xf32>
    %cst_4 = arith.constant 0.000000e+00 : f32
    %6 = vector.broadcast %cst_4 : f32 to vector<8x256xf32>
    %7 = arith.cmpf oeq, %5, %6 : vector<8x256xf32>
    %c0_5 = arith.constant 0 : index
    %c0_6 = arith.constant 0 : index
    %8 = vector.load %arg2[%c0_5, %c0_6] : memref<8x256xf32, #tpu.memory_space<vmem>>, vector<8x256xf32>
    %c0_7 = arith.constant 0 : index
    %c0_8 = arith.constant 0 : index
    %9 = vector.load %arg5[%c0_7, %c0_8] : memref<1x256xf32, #tpu.memory_space<vmem>>, vector<1x256xf32>
    %cst_9 = arith.constant 0.000000e+00 : f32
    %10 = vector.broadcast %cst_9 : f32 to vector<8x256xf32>
    %11 = arith.select %7, %8, %10 : vector<8x256xi1>, vector<8x256xf32>
    %cst_10 = arith.constant dense<0.000000e+00> : vector<256xf32>
    %12 = vector.multi_reduction <add>, %11, %cst_10 [0] : vector<8x256xf32> to vector<256xf32>
    %13 = vector.shape_cast %12 : vector<256xf32> to vector<1x256xf32>
    %14 = arith.addf %9, %13 : vector<1x256xf32>
    %c0_11 = arith.constant 0 : index
    %c0_12 = arith.constant 0 : index
    %15 = vector.load %arg5[%c0_11, %c0_12] : memref<1x256xf32, #tpu.memory_space<vmem>>, vector<1x256xf32>
    tpu.vector_store %arg5[%c0_11, %c0_12], %14 {strides = array<i32>} : memref<1x256xf32, #tpu.memory_space<vmem>>, vector<1x256xf32>,
    %16 = vector.extract_strided_slice %3 {offsets = [0, 0], sizes = [8, 8], strides = [1, 1]} : vector<8x16xbf16> to vector<8x8xbf16>
    %cst_13 = arith.constant 0.000000e+00 : bf16
    %17 = vector.broadcast %cst_13 : bf16 to vector<8x8xbf16>
    %18 = arith.cmpf oge, %16, %17 : vector<8x8xbf16>
    %19 = arith.extui %18 : vector<8x8xi1> to vector<8x8xi32>
    %20 = arith.sitofp %19 : vector<8x8xi32> to vector<8x8xf32>
    %c0_14 = arith.constant 0 : index
    %c0_15 = arith.constant 0 : index
    %21 = vector.load %arg6[%c0_14, %c0_15] : memref<1x8xf32, #tpu.memory_space<vmem>>, vector<1x8xf32>
    %cst_16 = arith.constant dense<0.000000e+00> : vector<8xf32>
    %22 = vector.multi_reduction <add>, %20, %cst_16 [0] : vector<8x8xf32> to vector<8xf32>
    %23 = vector.shape_cast %22 : vector<8xf32> to vector<1x8xf32>
    %24 = arith.addf %21, %23 : vector<1x8xf32>
    %c0_17 = arith.constant 0 : index
    %c0_18 = arith.constant 0 : index
    %25 = vector.load %arg6[%c0_17, %c0_18] : memref<1x8xf32, #tpu.memory_space<vmem>>, vector<1x8xf32>
    tpu.vector_store %arg6[%c0_17, %c0_18], %24 {strides = array<i32>} : memref<1x8xf32, #tpu.memory_space<vmem>>, vector<1x8xf32>,
    return
  }
  func.func @transform_0(%arg0: i32, %arg1: i32) -> (i32, i32) {
    %c1_i32 = arith.constant 1 : i32
    %0 = arith.muli %arg0, %c1_i32 : i32
    %1 = arith.addi %0, %arg1 : i32
    %c0_i32 = arith.constant 0 : i32
    %2 = arith.minsi %1, %c0_i32 : i32
    %c0_i32_0 = arith.constant 0 : i32
    %c0_i32_1 = arith.constant 0 : i32
    return %2, %c0_i32_0 : i32, i32
  }
  func.func @transform_1(%arg0: i32, %arg1: i32) -> (i32, i32) {
    %c1_i32 = arith.constant 1 : i32
    %0 = arith.muli %arg0, %c1_i32 : i32
    %1 = arith.addi %0, %arg1 : i32
    %c0_i32 = arith.constant 0 : i32
    %c0_i32_0 = arith.constant 0 : i32
    return %1, %c0_i32 : i32, i32
  }
  func.func @transform_2(%arg0: i32, %arg1: i32) -> (i32, i32) {
    %c0_i32 = arith.constant 0 : i32
    %c0_i32_0 = arith.constant 0 : i32
    %c0_i32_1 = arith.constant 0 : i32
    return %c0_i32, %c0_i32_0 : i32, i32
  }
  func.func @transform_3(%arg0: i32, %arg1: i32) -> (i32, i32) {
    %c0_i32 = arith.constant 0 : i32
    %c0_i32_0 = arith.constant 0 : i32
    return %arg0, %c0_i32 : i32, i32
  }
  func.func @transform_4(%arg0: i32, %arg1: i32) -> (i32, i32) {
    %c0_i32 = arith.constant 0 : i32
    %c0_i32_0 = arith.constant 0 : i32
    return %arg0, %c0_i32 : i32, i32
  }
}

</mosaic_0001>

<llo_original>
// kernel: tpu_custom_call.1
$region0: #{tpu_custom_call.1}
  #allocation0 [shape = 'u32[]', space=smem, size = 0x4, offset = 0x4, fixed_abs, tag = 'smem constant byte address 0x4 - core index']
  #allocation1 [shape = 'u32[72,128]{1,0:T(1,128)}', space=vmem, size = 0x9000, scoped, tag = 'internal scratch']
  %s0 = inlined_call_operand.hbm [shape: f32[8,256], index: 0, kind: input, shape index: {}]
  %s1 = inlined_call_operand.hbm [shape: bf16[8,16], index: 1, kind: input, shape index: {}]
  %s2 = inlined_call_operand.hbm [shape: bf16[16,256], index: 2, kind: input, shape index: {}]
  %s3 = inlined_call_operand.hbm [shape: f32[1,256], index: 3, kind: output, shape index: {0}]
  %s4 = inlined_call_operand.hbm [shape: f32[1,8], index: 4, kind: output, shape index: {1}]
  %5 = xla_tuple %s3, %s4
  %s6 = sld [smem:[#allocation0]]
  $region46: #{tpu_custom_call.1} parent=0
    _
  %s8 = ssub.s32 1, %s6
  %s9 = scalar_select 0, %s8, %s6
  $region1: #{tpu_custom_call.1} parent=0
    #allocation2 [shape = 'u8[8192]{0}', space=vmem, size = 0x2000, scoped, tag = 'input window, operand 0, single buffered']
    #allocation3 [shape = 's32[1]{0}', space=sflag, size = 0x4, scoped, tag = 'scoped memory for tpu_custom_call.1']
    #allocation4 [shape = 's32[1]{0}', space=sflag, size = 0x4, scoped, tag = 'scoped memory for tpu_custom_call.1']
    #allocation5 [shape = 'u8[2048]{0}', space=vmem, size = 0x800, scoped, tag = 'input window, operand 1, single buffered']
    #allocation6 [shape = 's32[1]{0}', space=sflag, size = 0x4, scoped, tag = 'scoped memory for tpu_custom_call.1']
    #allocation7 [shape = 'u8[8192]{0}', space=vmem, size = 0x2000, scoped, tag = 'input window, operand 2, single buffered']
    #allocation8 [shape = 'u8[1024]{0}', space=vmem, size = 0x400, scoped, tag = 'output window, operand 0, single buffered']
    #allocation9 [shape = 'u8[512]{0}', space=vmem, size = 0x400, scoped, tag = 'output window, operand 1, single buffered']
    #allocation10 [shape = 's32[1]{0}', space=sflag, size = 0x4, scoped, tag = 'scoped memory for tpu_custom_call.1']
    %10 = vsyncpa [#allocation3], 0
    %11 = vsyncpa [#allocation6], 0
    %12 = vsyncpa [#allocation4], 0
    %13 = vsyncpa [#allocation10], 0
    // Predicated region
    $region2: #{tpu_custom_call.1} parent=1 // pred_check
      _
    $region3: #{tpu_custom_call.1} parent=1 // pred_check_branch
      %15 = sbr.rel (0) target = $region5
    $region4: #{tpu_custom_call.1} parent=1 // pred_region
      %s16 = sadd.s32 0, 0
      %p17 = scmp.lt.s32.totalorder %s16, 0
      %s18 = scalar_select %p17, %s16, 0
      %20 = vsyncadd [#allocation3], 0
      %s21 = smul.addr %s18, 2
      %s22 = smul.addr %s21, 8
      %s23 = scalar_lea.hbm %s0, %s22
      %s25 = sshll.u32 %s23, 4
      %s26 = int_to_ptr.hbm [resolvable:$true] %s25
      %s27 = sshll.u32 [#allocation2], 4
      %s28 = int_to_ptr.vmem [resolvable:$true] %s27
      %30 = dma.hbm_to_vmem [thread:$0]  %s26, 256, %s28, [#allocation3]
    $region5: #{tpu_custom_call.1} parent=1 // pred_fallthru
      _
    // Predicated region
    $region6: #{tpu_custom_call.1} parent=1 // pred_check
      _
    $region7: #{tpu_custom_call.1} parent=1 // pred_check_branch
      %32 = sbr.rel (0) target = $region9
    $region8: #{tpu_custom_call.1} parent=1 // pred_region
      %s33 = sadd.s32 0, 0
      %35 = vsyncadd [#allocation6], 0
      %s36 = smul.addr %s33, 4
      %s37 = scalar_lea.hbm %s1, %s36
      %s39 = sshll.u32 %s37, 4
      %s40 = int_to_ptr.hbm [resolvable:$true] %s39
      %s41 = sshll.u32 [#allocation5], 4
      %s42 = int_to_ptr.vmem [resolvable:$true] %s41
      %44 = dma.hbm_to_vmem [thread:$0]  %s40, 64, %s42, [#allocation6]
    $region9: #{tpu_custom_call.1} parent=1 // pred_fallthru
      _
    // Predicated region
    $region10: #{tpu_custom_call.1} parent=1 // pred_check
      _
    $region11: #{tpu_custom_call.1} parent=1 // pred_check_branch
      %46 = sbr.rel (0) target = $region13
    $region12: #{tpu_custom_call.1} parent=1 // pred_region
      %48 = vsyncadd [#allocation6], 0
      %s49 = sshll.u32 %s2, 4
      %s50 = int_to_ptr.hbm [resolvable:$true] %s49
      %s51 = sshll.u32 [#allocation7], 4
      %s52 = int_to_ptr.vmem [resolvable:$true] %s51
      %57 = dma.hbm_to_vmem [thread:$0]  %s50, 256, %s52, [#allocation6], 128, 128, 8
    $region13: #{tpu_custom_call.1} parent=1 // pred_fallthru
      _
    // Predicated region
    $region14: #{tpu_custom_call.1} parent=1 // pred_check
      _
    $region15: #{tpu_custom_call.1} parent=1 // pred_check_branch
      %59 = sbr.rel (0) target = $region17
    $region16: #{tpu_custom_call.1} parent=1 // pred_region
      %61 = dma.done [#allocation3], 256
    $region17: #{tpu_custom_call.1} parent=1 // pred_fallthru
      _
    // Predicated region
    $region18: #{tpu_custom_call.1} parent=1 // pred_check
      _
    $region19: #{tpu_custom_call.1} parent=1 // pred_check_branch
      %63 = sbr.rel (0) target = $region21
    $region20: #{tpu_custom_call.1} parent=1 // pred_region
      %65 = dma.done [#allocation6], 64
    $region21: #{tpu_custom_call.1} parent=1 // pred_fallthru
      _
    // Predicated region
    $region22: #{tpu_custom_call.1} parent=1 // pred_check
      _
    $region23: #{tpu_custom_call.1} parent=1 // pred_check_branch
      %67 = sbr.rel (0) target = $region25
    $region24: #{tpu_custom_call.1} parent=1 // pred_region
      %69 = dma.done [#allocation6], 256
    $region25: #{tpu_custom_call.1} parent=1 // pred_fallthru
      _
    %s70 = sadd.s32 0, 0
    %p71 = scmp.lt.s32.totalorder %s70, 0
    %s72 = scalar_select %p71, %s70, 0
    %s73 = sadd.s32 0, 0
    %p75 = scmp.eq.s32.totalorder 0, 0
    // Predicated region
    $region26: #{tpu_custom_call.1} parent=1 // pred_check
      %p76 = pneg %p75
    $region27: #{tpu_custom_call.1} parent=1 // pred_check_branch
      %78 = sbr.rel (%p76) target = $region29
    $region28: #{tpu_custom_call.1} parent=1 // pred_region
      %v79 = vlaneseq
      %vm80 = vcmp.ge.s32.totalorder %v79, 0
      %vm81 = vcmp.lt.s32.totalorder %v79, 256
      %vm82 = vmand %vm80, %vm81
      %83 = vst.msk [vmem:[#allocation8] sm:$0x3] %vm82, 0.0
      %vm84 = vcmask 57344
      %85 = vst.msk [vmem:[#allocation9] sm:$0x1] %vm84, 0.0
    $region29: #{tpu_custom_call.1} parent=1 // pred_fallthru
      _
    %v86 = vld [vmem:[#allocation5] sm:$0xf]
    %v87 = vld [vmem:[#allocation7] sm:$0xff]
    %v88 = vld [vmem:[#allocation7 + $0x8] sm:$0xff]
    %v91 = vunpack.c.l.b16 %v87
    %v92 = vunpack.c.h.b16 %v87
    %v93 = vunpack.c.l.b16 %v88
    %v94 = vunpack.c.h.b16 %v88
    %v95 = vpack.c.b16 %v93, %v91
    %v96 = vpack.c.b16 %v94, %v92
    %vm99 = vcmask 130048
    %v101 = vsel %vm99, %v86, 0
    %103 = vmatpush.bf16.msra.mxu0 0
    %104 = vmatpush.bf16.msra.mxu0 0
    %105 = vmatpush.bf16.msra.mxu0 0
    %106 = vmatpush.bf16.msra.mxu0 0
    %107 = vmatpush.bf16.msra.mxu0 0
    %108 = vmatpush.bf16.msra.mxu0 0
    %109 = vmatpush.bf16.msra.mxu0 0
    %110 = vmatpush.bf16.msra.mxu0 %v95
    %111 = vmatmul.bf16.gmra.mxu0 %v101
    %v112 = vpop.f32.mrf.mxu0
    %v113 = vadd.f32 0.0, %v112
    %v114 = vpop.f32.mrf.mxu0
    %115 = vdwg.mxu0
    %116 = vmatpush.bf16.msra.mxu0 0
    %117 = vmatpush.bf16.msra.mxu0 0
    %118 = vmatpush.bf16.msra.mxu0 0
    %119 = vmatpush.bf16.msra.mxu0 0
    %120 = vmatpush.bf16.msra.mxu0 0
    %121 = vmatpush.bf16.msra.mxu0 0
    %122 = vmatpush.bf16.msra.mxu0 0
    %123 = vmatpush.bf16.msra.mxu0 %v96
    %124 = vmatmul.bf16.gmra.mxu0 %v101
    %v125 = vpop.f32.mrf.mxu0
    %v126 = vadd.f32 0.0, %v125
    %v127 = vpop.f32.mrf.mxu0
    %128 = vdwg.mxu0
    %vm129 = vcmp.eq.f32.partialorder %v113, 0.0
    %vm130 = vcmp.eq.f32.partialorder %v126, 0.0
    %v131 = vld [vmem:[#allocation2] sm:$0xff]
    %v132 = vld [vmem:[#allocation2 + $0x8] sm:$0xff]
    %v133 = vld [vmem:[#allocation8] sm:$0x3]
    %v134 = vsel %vm129, %v131, 0.0
    %v135 = vsel %vm130, %v132, 0.0
    %v136 = vrot.slane %v134, 4
    %v137 = vadd.f32 %v134, %v136
    %v138 = vrot.slane %v137, 2
    %v139 = vadd.f32 %v137, %v138
    %v140 = vrot.slane %v139, 1
    %v141 = vadd.f32 %v139, %v140
    %v142 = vrot.slane %v135, 4
    %v143 = vadd.f32 %v135, %v142
    %v144 = vrot.slane %v143, 2
    %v145 = vadd.f32 %v143, %v144
    %v146 = vrot.slane %v145, 1
    %v147 = vadd.f32 %v145, %v146
    %v150 = vrot.slane %v147, 7
    %vm151 = vcmask 1040384
    %v152 = vsel %vm151, %v141, %v150
    %v154 = vadd.f32 %v133, %v152
    %v155 = vlaneseq
    %vm156 = vcmp.ge.s32.totalorder %v155, 0
    %vm157 = vcmp.lt.s32.totalorder %v155, 256
    %vm158 = vmand %vm156, %vm157
    %159 = vst.msk [vmem:[#allocation8] sm:$0x3] %vm158, %v154
    %v160 = vunpack.c.l.bf16 %v86
    %vm161 = vcmp.ge.f32.partialorder %v160, 0.0
    %v162 = vsel %vm161, 1, 0
    %v163 = vcvt.s32.f32 %v162
    %v164 = vld [vmem:[#allocation9] sm:$0x1]
    %vm165 = vcmask 64512
    %v166 = vsel %vm165, %v163, 0.0
    %v167 = vrot.slane %v166, 4
    %v168 = vadd.f32 %v166, %v167
    %v169 = vrot.slane %v168, 2
    %v170 = vadd.f32 %v168, %v169
    %v171 = vrot.slane %v170, 1
    %v172 = vadd.f32 %v170, %v171
    %v173 = vadd.f32 %v164, %v172
    %vm174 = vcmask 57344
    %175 = vst.msk [vmem:[#allocation9] sm:$0x1] %vm174, %v173
    // Predicated region
    $region30: #{tpu_custom_call.1} parent=1 // pred_check
      _
    $region31: #{tpu_custom_call.1} parent=1 // pred_check_branch
      %177 = sbr.rel (0) target = $region33
    $region32: #{tpu_custom_call.1} parent=1 // pred_region
      %179 = vsyncadd [#allocation4], 0
      %s181 = sshll.u32 [#allocation8], 4
      %s182 = int_to_ptr.vmem [resolvable:$true] %s181
      %s183 = sshll.u32 %s3, 4
      %s184 = int_to_ptr.hbm [resolvable:$true] %s183
      %186 = dma.vmem_to_hbm [thread:$0]  %s182, 32, %s184, [#allocation4]
    $region33: #{tpu_custom_call.1} parent=1 // pred_fallthru
      _
    // Predicated region
    $region34: #{tpu_custom_call.1} parent=1 // pred_check
      _
    $region35: #{tpu_custom_call.1} parent=1 // pred_check_branch
      %188 = sbr.rel (0) target = $region37
    $region36: #{tpu_custom_call.1} parent=1 // pred_region
      %190 = vsyncadd [#allocation10], 0
      %s192 = sshll.u32 [#allocation9], 4
      %s193 = int_to_ptr.vmem [resolvable:$true] %s192
      %s194 = sshll.u32 %s4, 4
      %s195 = int_to_ptr.hbm [resolvable:$true] %s194
      %197 = dma.vmem_to_hbm [thread:$0]  %s193, 16, %s195, [#allocation10]
    $region37: #{tpu_custom_call.1} parent=1 // pred_fallthru
      _
    // Predicated region
    $region38: #{tpu_custom_call.1} parent=1 // pred_check
      _
    $region39: #{tpu_custom_call.1} parent=1 // pred_check_branch
      %199 = sbr.rel (0) target = $region41
    $region40: #{tpu_custom_call.1} parent=1 // pred_region
      %201 = dma.done [#allocation4], 32
    $region41: #{tpu_custom_call.1} parent=1 // pred_fallthru
      _
    // Predicated region
    $region42: #{tpu_custom_call.1} parent=1 // pred_check
      _
    $region43: #{tpu_custom_call.1} parent=1 // pred_check_branch
      %203 = sbr.rel (0) target = $region45
    $region44: #{tpu_custom_call.1} parent=1 // pred_region
      %205 = dma.done [#allocation10], 16
    $region45: #{tpu_custom_call.1} parent=1 // pred_fallthru
      _
    %206 = vsyncpa [#allocation3], 1
    %207 = vsyncpa [#allocation6], 1
    %208 = vsyncpa [#allocation4], 1
    %209 = vsyncpa [#allocation10], 1

</llo_original>
